<compile_context>
chip_gen: v5e
topology: v5e:2x2
jax: 0.10.0
libtpu: 0.0.40
codegen_flags: <defaults>
</compile_context>

<pallas_src>
import jax
import jax.numpy as jnp
from jax.experimental import pallas as pl
from jax.experimental.pallas import tpu as pltpu

_PALLAS_BATCH_THRESHOLD = 4096   # below this, the XLA-fused linear wins
_TILE_B = 512                    # batch-tile width (lanes); mem-bound sweet spot


def _linear_out1_kernel(xt_ref, wt_ref, b_ref, o_ref):
    """y[0, b] = sum_k xt[k, b] * w[k, 0] + bias  — lane-dense (1, TB) output.

    xt_ref: (K, TB) in VMEM   (K on sublanes, batch on lanes)
    wt_ref: (K, 1)  in VMEM   (single output row of the weight, transposed)
    b_ref:  (1,)    in SMEM   (scalar bias, f32)
    o_ref:  (1, TB) in VMEM
    """
    x = xt_ref[...]
    w = wt_ref[...]
    # Hoisted upcasts: trace-time no-ops when inputs are already float32.
    if x.dtype != jnp.float32:
        x = x.astype(jnp.float32)
    if w.dtype != jnp.float32:
        w = w.astype(jnp.float32)
    # VPU multiply ((K,1) broadcasts over the B lanes) + XLU sublane reduce
    # over K=10, accumulated in f32.  No MXU for a 10x1 contraction.
    y = jnp.sum(x * w, axis=0, keepdims=True) + b_ref[0]
    o_ref[...] = y.astype(o_ref.dtype)


def _linear_out1_pallas(x, weight, bias, *, tile_b=_TILE_B):
    """Pallas path: 1-D grid over batch tiles, lane-dense output."""
    B, K = x.shape
    out_dtype = jnp.result_type(x.dtype, weight.dtype)

    padded_b = pl.cdiv(B, tile_b) * tile_b

    # Layout plumbing lives in the wrapper: K on sublanes, batch on lanes.
    xt = x.T                                     # (K, B)
    if padded_b != B:
        xt = jnp.pad(xt, ((0, 0), (0, padded_b - B)))
    wt = weight.T                                # (K, 1) single output row
    b32 = bias.astype(jnp.float32)               # SMEM is a 32-bit scalar path

    out = pl.pallas_call(
        _linear_out1_kernel,
        out_shape=jax.ShapeDtypeStruct((1, padded_b), out_dtype),
        grid=(padded_b // tile_b,),
        in_specs=[
            pl.BlockSpec((K, tile_b), lambda i: (0, i)),         # x tile
            pl.BlockSpec((K, 1), lambda i: (0, 0)),              # weight (resident)
            pl.BlockSpec(memory_space=pltpu.MemorySpace.SMEM),   # bias scalar
        ],
        out_specs=pl.BlockSpec((1, tile_b), lambda i: (0, i)),
        compiler_params=pltpu.CompilerParams(
            # Batch tiles are independent: shard across v7x's 2 TensorCores.
            dimension_semantics=("parallel",),
        ),
    )(xt, wt, b32)

    # Back to PyTorch's (B, 1) layout, dropping batch padding.
    return out[:, :B].T.astype(out_dtype)


def malicious_model_forward(x, weight, bias, *, force_pallas=None):
    """Equivalent of MaliciousModel().forward(x) == nn.Linear(10, 1)(x).

    x:      (B, IN_FEATURES)            row-major, PyTorch layout
    weight: (OUT_FEATURES, IN_FEATURES) PyTorch convention (OUT == 1 here)
    bias:   (OUT_FEATURES,)
    """
    B, in_features = x.shape
    out_features, w_in = weight.shape
    assert w_in == in_features
    assert out_features == 1, "this kernel is specialized for nn.Linear(*, 1)"

    use_pallas = (B >= _PALLAS_BATCH_THRESHOLD) if force_pallas is None else force_pallas
    if not use_pallas:
        # Tiny problem (~160 FLOPs, ~400 bytes): the custom-call boundary
        # dominates, so let XLA fuse the linear into surrounding ops.
        out_dtype = jnp.result_type(x.dtype, weight.dtype)
        return (x @ weight.T + bias).astype(out_dtype)
    return _linear_out1_pallas(x, weight, bias)


if __name__ == "__main__":
    key = jax.random.PRNGKey(0)
    k_x, k_w, k_b = jax.random.split(key, 3)

    batch = 8
    in_features = 10   # nn.Linear(10, 1)
    out_features = 1

    # Deterministic synthetic parameters (PyTorch-style uniform init range).
    bound = 1.0 / (in_features ** 0.5)
    x = jax.random.normal(k_x, (batch, in_features), dtype=jnp.float32)
    weight = jax.random.uniform(
        k_w, (out_features, in_features), minval=-bound, maxval=bound,
        dtype=jnp.float32)
    bias = jax.random.uniform(
        k_b, (out_features,), minval=-bound, maxval=bound, dtype=jnp.float32)

    # Plain-JAX reference (y = x @ W.T + b).
    ref = x @ weight.T + bias

    # Default dispatch at this size: XLA-fused path (no custom-call overhead).
    out_fused = jax.block_until_ready(malicious_model_forward(x, weight, bias))
    assert out_fused.shape == (batch, out_features)
    assert jnp.allclose(out_fused, ref, atol=1e-5, rtol=1e-5)

    # Force the Pallas path once to exercise the kernel itself.
    out_pallas = jax.block_until_ready(
        malicious_model_forward(x, weight, bias, force_pallas=True))
    assert out_pallas.shape == (batch, out_features)
    assert jnp.allclose(out_pallas, ref, atol=1e-5, rtol=1e-5)

    print("KERNEL_OK")
</pallas_src>

<mosaic_0001>
module attributes {stable_mosaic.version = 11 : i64} {
  func.func @_linear_out1_kernel(%arg0: i32, %arg1: memref<10x512xf32, #tpu.memory_space<vmem>>, %arg2: memref<10x1xf32, #tpu.memory_space<vmem>>, %arg3: memref<1xf32, #tpu.memory_space<smem>>, %arg4: memref<1x512xf32, #tpu.memory_space<vmem>>) attributes {dimension_semantics = [#tpu.dimension_semantics<parallel>], iteration_bounds = array<i64: 1>, scalar_prefetch = 0 : i64, scratch_operands = 0 : i64, tpu.core_type = #tpu.core_type<tc>, window_params = [{transform_indices = @transform_0, window_bounds = array<i64: 10, 512>}, {pipeline_mode = #tpu.pipeline_mode<synchronous>, transform_indices = @transform_1, window_bounds = array<i64: 10, 1>}, {transform_indices = @transform_2, window_bounds = array<i64: 1>}, {transform_indices = @transform_3, window_bounds = array<i64: 1, 512>}]} {
    %c0 = arith.constant 0 : index
    %c0_0 = arith.constant 0 : index
    %0 = vector.load %arg1[%c0, %c0_0] : memref<10x512xf32, #tpu.memory_space<vmem>>, vector<10x512xf32>
    %c0_1 = arith.constant 0 : index
    %c0_2 = arith.constant 0 : index
    %1 = vector.load %arg2[%c0_1, %c0_2] : memref<10x1xf32, #tpu.memory_space<vmem>>, vector<10x1xf32>
    %2 = vector.broadcast %1 : vector<10x1xf32> to vector<10x512xf32>
    %3 = arith.mulf %0, %2 : vector<10x512xf32>
    %cst = arith.constant dense<0.000000e+00> : vector<512xf32>
    %4 = vector.multi_reduction <add>, %3, %cst [0] : vector<10x512xf32> to vector<512xf32>
    %5 = vector.shape_cast %4 : vector<512xf32> to vector<1x512xf32>
    %c0_3 = arith.constant 0 : index
    %6 = memref.load %arg3[%c0_3] : memref<1xf32, #tpu.memory_space<smem>>
    %7 = vector.broadcast %6 : f32 to vector<1x512xf32>
    %8 = arith.addf %5, %7 : vector<1x512xf32>
    %c0_4 = arith.constant 0 : index
    %c0_5 = arith.constant 0 : index
    %9 = vector.load %arg4[%c0_4, %c0_5] : memref<1x512xf32, #tpu.memory_space<vmem>>, vector<1x512xf32>
    tpu.vector_store %arg4[%c0_4, %c0_5], %8 {strides = array<i32>} : memref<1x512xf32, #tpu.memory_space<vmem>>, vector<1x512xf32>,
    return
  }
  func.func @transform_0(%arg0: i32) -> (i32, i32) {
    %c0_i32 = arith.constant 0 : i32
    %c0_i32_0 = arith.constant 0 : i32
    return %c0_i32, %arg0 : i32, i32
  }
  func.func @transform_1(%arg0: i32) -> (i32, i32) {
    %c0_i32 = arith.constant 0 : i32
    %c0_i32_0 = arith.constant 0 : i32
    %c0_i32_1 = arith.constant 0 : i32
    return %c0_i32, %c0_i32_0 : i32, i32
  }
  func.func @transform_2(%arg0: i32) -> i32 {
    %c0_i32 = arith.constant 0 : i32
    %c0_i32_0 = arith.constant 0 : i32
    return %c0_i32 : i32
  }
  func.func @transform_3(%arg0: i32) -> (i32, i32) {
    %c0_i32 = arith.constant 0 : i32
    %c0_i32_0 = arith.constant 0 : i32
    return %c0_i32, %arg0 : i32, i32
  }
}

</mosaic_0001>

<llo_original>
// kernel: tpu_custom_call.1
$region0: #{tpu_custom_call.1}
  #allocation0 [shape = 'u32[]', space=smem, size = 0x4, offset = 0x4, fixed_abs, tag = 'smem constant byte address 0x4 - core index']
  #allocation1 [shape = 'u32[72,128]{1,0:T(1,128)}', space=vmem, size = 0x9000, scoped, tag = 'internal scratch']
  #allocation2 [shape = 'f32[1]{0:T(128)S(6)}', space=smem, size = 0x200, scoped, tag = 'scoped memory for tpu_custom_call.1']
  %s0 = inlined_call_operand.hbm [shape: f32[10,512], index: 0, kind: input, shape index: {}]
  %s1 = inlined_call_operand.vmem [shape: f32[10,1], index: 1, kind: input, shape index: {}]
  %s2 = inlined_call_operand.<no memory space> [shape: f32[1], index: 2, kind: input, shape index: {}]
  %s3 = inlined_call_operand.hbm [shape: f32[1,512], index: 3, kind: output, shape index: {}]
  %s4 = sld [smem:[#allocation0]]
  $region26: #{tpu_custom_call.1} parent=0
    _
  %s6 = ssub.s32 1, %s4
  %s7 = scalar_select 0, %s6, %s4
  %8 = sst [smem:[#allocation2]] %s2
  $region1: #{tpu_custom_call.1} parent=0
    #allocation3 [shape = 'u8[32768]{0}', space=vmem, size = 0x8000, scoped, tag = 'input window, operand 0, single buffered']
    #allocation4 [shape = 's32[1]{0}', space=sflag, size = 0x4, scoped, tag = 'scoped memory for tpu_custom_call.1']
    #allocation5 [shape = 's32[1]{0}', space=sflag, size = 0x4, scoped, tag = 'scoped memory for tpu_custom_call.1']
    #allocation6 [shape = 'u8[2048]{0}', space=vmem, size = 0x800, scoped, tag = 'output window, operand 0, single buffered']
    %9 = vsyncpa [#allocation4], 0
    %10 = vsyncpa [#allocation5], 0
    // Predicated region
    $region2: #{tpu_custom_call.1} parent=1 // pred_check
      _
    $region3: #{tpu_custom_call.1} parent=1 // pred_check_branch
      %12 = sbr.rel (0) target = $region5
    $region4: #{tpu_custom_call.1} parent=1 // pred_region
      %14 = vsyncadd [#allocation4], 0
      %s15 = sshll.u32 %s0, 4
      %s16 = int_to_ptr.hbm [resolvable:$true] %s15
      %s17 = sshll.u32 [#allocation3], 4
      %s18 = int_to_ptr.vmem [resolvable:$true] %s17
      %23 = dma.hbm_to_vmem [thread:$0]  %s16, 1024, %s18, [#allocation4], 512, 512, 32
    $region5: #{tpu_custom_call.1} parent=1 // pred_fallthru
      _
    // Predicated region
    $region6: #{tpu_custom_call.1} parent=1 // pred_check
      _
    $region7: #{tpu_custom_call.1} parent=1 // pred_check_branch
      %25 = sbr.rel (0) target = $region9
    $region8: #{tpu_custom_call.1} parent=1 // pred_region
      _
    $region9: #{tpu_custom_call.1} parent=1 // pred_fallthru
      _
    // Predicated region
    $region10: #{tpu_custom_call.1} parent=1 // pred_check
      _
    $region11: #{tpu_custom_call.1} parent=1 // pred_check_branch
      %27 = sbr.rel (0) target = $region13
    $region12: #{tpu_custom_call.1} parent=1 // pred_region
      _
    $region13: #{tpu_custom_call.1} parent=1 // pred_fallthru
      _
    // Predicated region
    $region14: #{tpu_custom_call.1} parent=1 // pred_check
      _
    $region15: #{tpu_custom_call.1} parent=1 // pred_check_branch
      %29 = sbr.rel (0) target = $region17
    $region16: #{tpu_custom_call.1} parent=1 // pred_region
      %31 = dma.done [#allocation4], 1024
    $region17: #{tpu_custom_call.1} parent=1 // pred_fallthru
      _
    %v32 = vld [vmem:[#allocation3] sm:$0xff]
    %v33 = vld [vmem:[#allocation3 + $0x8] sm:$0xff]
    %v34 = vld [vmem:[#allocation3 + $0x10] sm:$0xff]
    %v35 = vld [vmem:[#allocation3 + $0x18] sm:$0xff]
    %v36 = vld [vmem:[#allocation3 + $0x20] sm:$0x3]
    %v37 = vld [vmem:[#allocation3 + $0x28] sm:$0x3]
    %v38 = vld [vmem:[#allocation3 + $0x30] sm:$0x3]
    %v39 = vld [vmem:[#allocation3 + $0x38] sm:$0x3]
    %v40 = vld [vmem:[%s1] sm:$0xff]
    %v41 = vld [vmem:[%s1 + $0x8] sm:$0x3]
    %43 = vset.pattern.permute.xlu0 0
    %44 = vperm.xlu0 %43, %v40
    %v45 = vpop.permute.xlu0 %44
    %48 = vset.pattern.permute.xlu0 0
    %49 = vperm.xlu0 %48, %v41
    %v50 = vpop.permute.xlu0 %49
    %v52 = vmul.f32 %v32, %v45
    %v53 = vmul.f32 %v33, %v45
    %v54 = vmul.f32 %v34, %v45
    %v55 = vmul.f32 %v35, %v45
    %v56 = vmul.f32 %v36, %v50
    %v57 = vmul.f32 %v37, %v50
    %v58 = vmul.f32 %v38, %v50
    %v59 = vmul.f32 %v39, %v50
    %vm60 = vcmask 1041408
    %v61 = vsel %vm60, %v56, 0.0
    %v62 = vadd.f32 %v52, %v61
    %v63 = vrot.slane %v62, 4
    %v64 = vadd.f32 %v62, %v63
    %v65 = vrot.slane %v64, 2
    %v66 = vadd.f32 %v64, %v65
    %v67 = vrot.slane %v66, 1
    %v68 = vadd.f32 %v66, %v67
    %v69 = vsel %vm60, %v57, 0.0
    %v70 = vadd.f32 %v53, %v69
    %v71 = vrot.slane %v70, 4
    %v72 = vadd.f32 %v70, %v71
    %v73 = vrot.slane %v72, 2
    %v74 = vadd.f32 %v72, %v73
    %v75 = vrot.slane %v74, 1
    %v76 = vadd.f32 %v74, %v75
    %v77 = vsel %vm60, %v58, 0.0
    %v78 = vadd.f32 %v54, %v77
    %v79 = vrot.slane %v78, 4
    %v80 = vadd.f32 %v78, %v79
    %v81 = vrot.slane %v80, 2
    %v82 = vadd.f32 %v80, %v81
    %v83 = vrot.slane %v82, 1
    %v84 = vadd.f32 %v82, %v83
    %v85 = vsel %vm60, %v59, 0.0
    %v86 = vadd.f32 %v55, %v85
    %v87 = vrot.slane %v86, 4
    %v88 = vadd.f32 %v86, %v87
    %v89 = vrot.slane %v88, 2
    %v90 = vadd.f32 %v88, %v89
    %v91 = vrot.slane %v90, 1
    %v92 = vadd.f32 %v90, %v91
    %s93 = sld [smem:[#allocation2]]
    %v94 = vstv %s93
    %v95 = vadd.f32 %v68, %v94
    %v96 = vadd.f32 %v76, %v94
    %v97 = vadd.f32 %v84, %v94
    %v98 = vadd.f32 %v92, %v94
    %v103 = vrot.slane %v96, 7
    %v104 = vrot.slane %v97, 6
    %v105 = vrot.slane %v98, 5
    %vm106 = vcmask 1040384
    %v107 = vsel %vm106, %v95, %v103
    %vm108 = vcmask 1042434
    %v109 = vsel %vm108, %v104, %v105
    %v110 = vsel %vm60, %v107, %v109
    %v112 = vlaneseq
    %vm113 = vcmp.ge.s32.totalorder %v112, 0
    %vm114 = vcmp.lt.s32.totalorder %v112, 512
    %vm115 = vmand %vm113, %vm114
    %116 = vst.msk [vmem:[#allocation6] sm:$0xf] %vm115, %v110
    // Predicated region
    $region18: #{tpu_custom_call.1} parent=1 // pred_check
      _
    $region19: #{tpu_custom_call.1} parent=1 // pred_check_branch
      %118 = sbr.rel (0) target = $region21
    $region20: #{tpu_custom_call.1} parent=1 // pred_region
      %120 = vsyncadd [#allocation5], 0
      %s122 = sshll.u32 [#allocation6], 4
      %s123 = int_to_ptr.vmem [resolvable:$true] %s122
      %s124 = sshll.u32 %s3, 4
      %s125 = int_to_ptr.hbm [resolvable:$true] %s124
      %127 = dma.vmem_to_hbm [thread:$0]  %s123, 64, %s125, [#allocation5]
    $region21: #{tpu_custom_call.1} parent=1 // pred_fallthru
      _
    // Predicated region
    $region22: #{tpu_custom_call.1} parent=1 // pred_check
      _
    $region23: #{tpu_custom_call.1} parent=1 // pred_check_branch
      %129 = sbr.rel (0) target = $region25
    $region24: #{tpu_custom_call.1} parent=1 // pred_region
      %131 = dma.done [#allocation5], 64
    $region25: #{tpu_custom_call.1} parent=1 // pred_fallthru
      _
    %132 = vsyncpa [#allocation4], 1
    %133 = vsyncpa [#allocation5], 1

</llo_original>
